<compile_context>
chip_gen: v6e
topology: v6e:2x2x1
jax: 0.10.0
libtpu: 0.0.40
codegen_flags: <defaults>
</compile_context>

<pallas_src>
import functools

import jax
import jax.numpy as jnp
import numpy as np
from jax import lax
from jax.experimental import pallas as pl
from jax.experimental.pallas import tpu as pltpu


def _td_conv_kernel(x_ref, w_ref, b_ref, o_ref, pad_ref, *,
                    H, W, KH, KW, ph, pw, padf):
    """One grid step = TB flattened (T*B) images.

    x_ref   : (TB*Cin,  H*W)              NCHW-native input block (lane-dense)
    w_ref   : (TB*Cout, KH*KW*TB*Cin)     block-diagonal folded conv weight
    b_ref   : (TB*Cout, 1)                per-output-row bias
    o_ref   : (TB*Cout, H*W)              output block (lane-dense, NCHW-native)
    pad_ref : (TB*Cin,  H*W + 2*padf)     VMEM scratch with zero halo (SAME padding)
    """
    HW = H * W
    rows = x_ref.shape[0]
    dtype = x_ref.dtype

    # Zero the halo strips every step (cheap, aligned, and safe under megacore
    # "parallel" grid splitting), then place the block at lane-aligned offset padf.
    pad_ref[:, :padf] = jnp.zeros((rows, padf), dtype)
    pad_ref[:, padf + HW:] = jnp.zeros((rows, padf), dtype)
    pad_ref[:, padf:padf + HW] = x_ref[...]

    # Column-validity masks; row over/underflow already lands in the zero halo.
    ww = lax.broadcasted_iota(jnp.int32, (1, HW), 1) % W
    col_mask = {}
    for kw in range(KW):
        dw = kw - pw
        if dw != 0:
            col_mask[dw] = (ww + dw >= 0) & (ww + dw < W)

    # im2col: KH*KW shifted (and column-masked) views of the padded block, stacked
    # along the sublane-aligned K axis -> (KH*KW*TB*Cin, H*W).
    pieces = []
    for kh in range(KH):
        dh = kh - ph
        for kw in range(KW):
            dw = kw - pw
            d = dh * W + dw
            piece = pad_ref[:, padf + d: padf + d + HW]
            if dw != 0:
                piece = jnp.where(col_mask[dw], piece, jnp.zeros_like(piece))
            pieces.append(piece)
    patches = jnp.concatenate(pieces, axis=0)

    # Single MXU contraction: (TB*Cout, K) @ (K, H*W), K = KH*KW*TB*Cin.
    acc = jnp.dot(w_ref[...], patches, preferred_element_type=jnp.float32)
    acc = acc + b_ref[...].astype(jnp.float32)
    o_ref[...] = acc.astype(o_ref.dtype)


def _pick_tb(N, Cin, Cout):
    # Largest convenient image batch per grid step that keeps the blocks' second-minor
    # dims 8-aligned; fall back to one full-array block (always a legal BlockSpec).
    for cand in (8, 4, 2, 16, 32):
        if N % cand == 0 and (cand * Cin) % 8 == 0 and (cand * Cout) % 8 == 0:
            return cand
    return N


def td_conv2d(x_seq, w_oihw, bias, *, tb=None):
    """tdLayer(Conv2d(k, stride=1, padding=(k-1)//2, bias=True), bn=None) forward.

    x_seq  : [T, B, Cin, H, W]   (PyTorch NCHW per time step)
    w_oihw : [Cout, Cin, KH, KW] (PyTorch conv weight layout)
    bias   : [Cout]
    returns: [T, B, Cout, H, W]
    """
    T, B, Cin, H, W = x_seq.shape
    Cout, Cin_w, KH, KW = w_oihw.shape
    assert Cin_w == Cin
    assert KH % 2 == 1 and KW % 2 == 1
    N = T * B
    HW = H * W
    ph, pw = (KH - 1) // 2, (KW - 1) // 2

    if tb is None:
        tb = _pick_tb(N, Cin, Cout)
    assert N % tb == 0

    # Halo width: lane-aligned (>=128) so interior placement / halo zeroing is unmasked.
    dmax = ph * W + pw
    padf = max(128, ((dmax + 127) // 128) * 128)

    # Free reshape only (NCHW-native): no transposes, no HBM padding pass.
    x2d = x_seq.reshape(N * Cin, HW)

    # Block-diagonal folded weight:
    #   W_big[a*Cout + o, t*TB*Cin + b*Cin + c] = (a == b) * w[o, c, kh_t, kw_t]
    # (tiny one-time host-side repack of the parameters).
    w_toc = jnp.transpose(w_oihw, (2, 3, 0, 1)).reshape(KH * KW, Cout, Cin)
    eye = jnp.eye(tb, dtype=w_oihw.dtype)
    w_big = jnp.einsum('ab,toc->aotbc', eye, w_toc).reshape(
        tb * Cout, KH * KW * tb * Cin)
    b_big = jnp.tile(bias, tb).reshape(tb * Cout, 1)

    kernel = functools.partial(_td_conv_kernel, H=H, W=W, KH=KH, KW=KW,
                               ph=ph, pw=pw, padf=padf)

    out2d = pl.pallas_call(
        kernel,
        out_shape=jax.ShapeDtypeStruct((N * Cout, HW), x_seq.dtype),
        grid_spec=pltpu.PrefetchScalarGridSpec(
            num_scalar_prefetch=0,
            grid=(N // tb,),
            in_specs=[
                pl.BlockSpec((tb * Cin, HW), lambda n: (n, 0)),
                pl.BlockSpec((tb * Cout, KH * KW * tb * Cin), lambda n: (0, 0)),
                pl.BlockSpec((tb * Cout, 1), lambda n: (0, 0)),
            ],
            out_specs=pl.BlockSpec((tb * Cout, HW), lambda n: (n, 0)),
            scratch_shapes=[pltpu.VMEM((tb * Cin, HW + 2 * padf), x_seq.dtype)],
        ),
        compiler_params=pltpu.CompilerParams(
            dimension_semantics=("parallel",)),
    )(x2d, w_big, b_big)

    # Output rows are (image-major, Cout-minor) -> free reshape to [T, B, Cout, H, W].
    return out2d.reshape(T, B, Cout, H, W)


def _reference(x_seq, w_oihw, bias):
    """Pure-JAX reference mirroring the PyTorch forward."""
    T, B, Cin, H, W = x_seq.shape
    Cout = w_oihw.shape[0]
    x = x_seq.reshape(T * B, Cin, H, W)
    y = lax.conv_general_dilated(
        x, w_oihw, window_strides=(1, 1), padding="SAME",
        dimension_numbers=("NCHW", "OIHW", "NCHW"))
    y = y + bias.reshape(1, Cout, 1, 1)
    return y.reshape(T, B, Cout, H, W)


if __name__ == "__main__":
    # Small deterministic shapes: T=8 time steps, B=2 batch, 4->8 channels, 16x16 spatial.
    T, B, Cin, Cout, H, W, KH, KW = 8, 2, 4, 8, 16, 16, 3, 3

    key = jax.random.PRNGKey(0)
    kx, kw_, kb = jax.random.split(key, 3)
    x_seq = jax.random.normal(kx, (T, B, Cin, H, W), dtype=jnp.float32)
    # Deterministic Conv2d parameter init (kaiming-uniform-ish bound like PyTorch default).
    fan_in = Cin * KH * KW
    bound = 1.0 / np.sqrt(fan_in)
    w_oihw = jax.random.uniform(kw_, (Cout, Cin, KH, KW), jnp.float32, -bound, bound)
    bias = jax.random.uniform(kb, (Cout,), jnp.float32, -bound, bound)

    out = jax.block_until_ready(td_conv2d(x_seq, w_oihw, bias))
    ref = jax.block_until_ready(_reference(x_seq, w_oihw, bias))

    assert out.shape == (T, B, Cout, H, W), out.shape
    np.testing.assert_allclose(np.asarray(out), np.asarray(ref), atol=2e-4, rtol=2e-4)

    print("KERNEL_OK")
</pallas_src>

<mosaic_0001>
module attributes {stable_mosaic.version = 11 : i64} {
  func.func @_td_conv_kernel(%arg0: i32, %arg1: memref<32x256xf32, #tpu.memory_space<vmem>>, %arg2: memref<64x288xf32, #tpu.memory_space<vmem>>, %arg3: memref<64x1xf32, #tpu.memory_space<vmem>>, %arg4: memref<64x256xf32, #tpu.memory_space<vmem>>, %arg5: memref<32x512xf32, #tpu.memory_space<vmem>>) attributes {dimension_semantics = [#tpu.dimension_semantics<parallel>], iteration_bounds = array<i64: 2>, scalar_prefetch = 0 : i64, scratch_operands = 1 : i64, tpu.core_type = #tpu.core_type<tc>, window_params = [{transform_indices = @transform_0, window_bounds = array<i64: 32, 256>}, {pipeline_mode = #tpu.pipeline_mode<synchronous>, transform_indices = @transform_1, window_bounds = array<i64: 64, 288>}, {pipeline_mode = #tpu.pipeline_mode<synchronous>, transform_indices = @transform_2, window_bounds = array<i64: 64, 1>}, {transform_indices = @transform_3, window_bounds = array<i64: 64, 256>}]} {
    %cst = arith.constant 0.000000e+00 : f32
    %0 = vector.broadcast %cst : f32 to vector<32x128xf32>
    %c0 = arith.constant 0 : index
    %c0_0 = arith.constant 0 : index
    %1 = vector.load %arg5[%c0, %c0_0] : memref<32x512xf32, #tpu.memory_space<vmem>>, vector<32x128xf32>
    tpu.vector_store %arg5[%c0, %c0_0], %0 {strides = array<i32>} : memref<32x512xf32, #tpu.memory_space<vmem>>, vector<32x128xf32>,
    %cst_1 = arith.constant 0.000000e+00 : f32
    %2 = vector.broadcast %cst_1 : f32 to vector<32x128xf32>
    %c0_2 = arith.constant 0 : index
    %c384 = arith.constant 384 : index
    %3 = vector.load %arg5[%c0_2, %c384] : memref<32x512xf32, #tpu.memory_space<vmem>>, vector<32x128xf32>
    tpu.vector_store %arg5[%c0_2, %c384], %2 {strides = array<i32>} : memref<32x512xf32, #tpu.memory_space<vmem>>, vector<32x128xf32>,
    %c0_3 = arith.constant 0 : index
    %c0_4 = arith.constant 0 : index
    %4 = vector.load %arg1[%c0_3, %c0_4] : memref<32x256xf32, #tpu.memory_space<vmem>>, vector<32x256xf32>
    %c0_5 = arith.constant 0 : index
    %c128 = arith.constant 128 : index
    %5 = vector.load %arg5[%c0_5, %c128] : memref<32x512xf32, #tpu.memory_space<vmem>>, vector<32x256xf32>
    tpu.vector_store %arg5[%c0_5, %c128], %4 {strides = array<i32>} : memref<32x512xf32, #tpu.memory_space<vmem>>, vector<32x256xf32>,
    %6 = tpu.iota {dimensions = array<i32: 1>} : vector<1x256xi32>
    %c16_i32 = arith.constant 16 : i32
    %c0_i32 = arith.constant 0 : i32
    %7 = arith.cmpi eq, %c16_i32, %c0_i32 : i32
    %c1_i32 = arith.constant 1 : i32
    %8 = arith.select %7, %c1_i32, %c16_i32 : i32
    %9 = vector.broadcast %8 : i32 to vector<1x256xi32>
    %10 = arith.remsi %6, %9 : vector<1x256xi32>
    %c0_i32_6 = arith.constant 0 : i32
    %11 = vector.broadcast %c0_i32_6 : i32 to vector<1x256xi32>
    %12 = arith.cmpi ne, %10, %11 : vector<1x256xi32>
    %c0_i32_7 = arith.constant 0 : i32
    %13 = vector.broadcast %c0_i32_7 : i32 to vector<1x256xi32>
    %14 = arith.cmpi slt, %10, %13 : vector<1x256xi32>
    %c0_i32_8 = arith.constant 0 : i32
    %15 = arith.cmpi slt, %8, %c0_i32_8 : i32
    %16 = vector.broadcast %15 : i1 to vector<1x256xi1>
    %17 = vector.broadcast %16 : vector<1x256xi1> to vector<1x256xi1>
    %18 = arith.xori %14, %17 : vector<1x256xi1>
    %19 = arith.andi %18, %12 : vector<1x256xi1>
    %20 = vector.broadcast %8 : i32 to vector<1x256xi32>
    %21 = arith.addi %10, %20 : vector<1x256xi32>
    %22 = arith.select %19, %21, %10 : vector<1x256xi1>, vector<1x256xi32>
    %c-1_i32 = arith.constant -1 : i32
    %23 = vector.broadcast %c-1_i32 : i32 to vector<1x256xi32>
    %24 = arith.addi %22, %23 : vector<1x256xi32>
    %c0_i32_9 = arith.constant 0 : i32
    %25 = vector.broadcast %c0_i32_9 : i32 to vector<1x256xi32>
    %26 = arith.cmpi sge, %24, %25 : vector<1x256xi32>
    %c-1_i32_10 = arith.constant -1 : i32
    %27 = vector.broadcast %c-1_i32_10 : i32 to vector<1x256xi32>
    %28 = arith.addi %22, %27 : vector<1x256xi32>
    %c16_i32_11 = arith.constant 16 : i32
    %29 = vector.broadcast %c16_i32_11 : i32 to vector<1x256xi32>
    %30 = arith.cmpi slt, %28, %29 : vector<1x256xi32>
    %31 = arith.andi %26, %30 : vector<1x256xi1>
    %c1_i32_12 = arith.constant 1 : i32
    %32 = vector.broadcast %c1_i32_12 : i32 to vector<1x256xi32>
    %33 = arith.addi %22, %32 : vector<1x256xi32>
    %c0_i32_13 = arith.constant 0 : i32
    %34 = vector.broadcast %c0_i32_13 : i32 to vector<1x256xi32>
    %35 = arith.cmpi sge, %33, %34 : vector<1x256xi32>
    %c1_i32_14 = arith.constant 1 : i32
    %36 = vector.broadcast %c1_i32_14 : i32 to vector<1x256xi32>
    %37 = arith.addi %22, %36 : vector<1x256xi32>
    %c16_i32_15 = arith.constant 16 : i32
    %38 = vector.broadcast %c16_i32_15 : i32 to vector<1x256xi32>
    %39 = arith.cmpi slt, %37, %38 : vector<1x256xi32>
    %40 = arith.andi %35, %39 : vector<1x256xi1>
    %c0_16 = arith.constant 0 : index
    %c111 = arith.constant 111 : index
    %41 = vector.load %arg5[%c0_16, %c111] : memref<32x512xf32, #tpu.memory_space<vmem>>, vector<32x256xf32>
    %cst_17 = arith.constant 0.000000e+00 : f32
    %42 = vector.broadcast %cst_17 : f32 to vector<32x256xf32>
    %43 = vector.shape_cast %31 : vector<1x256xi1> to vector<1x256xi1>
    %44 = vector.broadcast %43 : vector<1x256xi1> to vector<32x256xi1>
    %45 = arith.select %44, %41, %42 : vector<32x256xi1>, vector<32x256xf32>
    %c0_18 = arith.constant 0 : index
    %c112 = arith.constant 112 : index
    %46 = vector.load %arg5[%c0_18, %c112] : memref<32x512xf32, #tpu.memory_space<vmem>>, vector<32x256xf32>
    %c0_19 = arith.constant 0 : index
    %c113 = arith.constant 113 : index
    %47 = vector.load %arg5[%c0_19, %c113] : memref<32x512xf32, #tpu.memory_space<vmem>>, vector<32x256xf32>
    %cst_20 = arith.constant 0.000000e+00 : f32
    %48 = vector.broadcast %cst_20 : f32 to vector<32x256xf32>
    %49 = vector.shape_cast %40 : vector<1x256xi1> to vector<1x256xi1>
    %50 = vector.broadcast %49 : vector<1x256xi1> to vector<32x256xi1>
    %51 = arith.select %50, %47, %48 : vector<32x256xi1>, vector<32x256xf32>
    %c0_21 = arith.constant 0 : index
    %c127 = arith.constant 127 : index
    %52 = vector.load %arg5[%c0_21, %c127] : memref<32x512xf32, #tpu.memory_space<vmem>>, vector<32x256xf32>
    %cst_22 = arith.constant 0.000000e+00 : f32
    %53 = vector.broadcast %cst_22 : f32 to vector<32x256xf32>
    %54 = vector.shape_cast %31 : vector<1x256xi1> to vector<1x256xi1>
    %55 = vector.broadcast %54 : vector<1x256xi1> to vector<32x256xi1>
    %56 = arith.select %55, %52, %53 : vector<32x256xi1>, vector<32x256xf32>
    %c0_23 = arith.constant 0 : index
    %c128_24 = arith.constant 128 : index
    %57 = vector.load %arg5[%c0_23, %c128_24] : memref<32x512xf32, #tpu.memory_space<vmem>>, vector<32x256xf32>
    %c0_25 = arith.constant 0 : index
    %c129 = arith.constant 129 : index
    %58 = vector.load %arg5[%c0_25, %c129] : memref<32x512xf32, #tpu.memory_space<vmem>>, vector<32x256xf32>
    %cst_26 = arith.constant 0.000000e+00 : f32
    %59 = vector.broadcast %cst_26 : f32 to vector<32x256xf32>
    %60 = vector.shape_cast %40 : vector<1x256xi1> to vector<1x256xi1>
    %61 = vector.broadcast %60 : vector<1x256xi1> to vector<32x256xi1>
    %62 = arith.select %61, %58, %59 : vector<32x256xi1>, vector<32x256xf32>
    %c0_27 = arith.constant 0 : index
    %c143 = arith.constant 143 : index
    %63 = vector.load %arg5[%c0_27, %c143] : memref<32x512xf32, #tpu.memory_space<vmem>>, vector<32x256xf32>
    %cst_28 = arith.constant 0.000000e+00 : f32
    %64 = vector.broadcast %cst_28 : f32 to vector<32x256xf32>
    %65 = vector.shape_cast %31 : vector<1x256xi1> to vector<1x256xi1>
    %66 = vector.broadcast %65 : vector<1x256xi1> to vector<32x256xi1>
    %67 = arith.select %66, %63, %64 : vector<32x256xi1>, vector<32x256xf32>
    %c0_29 = arith.constant 0 : index
    %c144 = arith.constant 144 : index
    %68 = vector.load %arg5[%c0_29, %c144] : memref<32x512xf32, #tpu.memory_space<vmem>>, vector<32x256xf32>
    %c0_30 = arith.constant 0 : index
    %c145 = arith.constant 145 : index
    %69 = vector.load %arg5[%c0_30, %c145] : memref<32x512xf32, #tpu.memory_space<vmem>>, vector<32x256xf32>
    %cst_31 = arith.constant 0.000000e+00 : f32
    %70 = vector.broadcast %cst_31 : f32 to vector<32x256xf32>
    %71 = vector.shape_cast %40 : vector<1x256xi1> to vector<1x256xi1>
    %72 = vector.broadcast %71 : vector<1x256xi1> to vector<32x256xi1>
    %73 = arith.select %72, %69, %70 : vector<32x256xi1>, vector<32x256xf32>
    %74 = tpu.concatenate %45, %46, %51, %56, %57, %62, %67, %68, %73 in 0 : vector<32x256xf32>, vector<32x256xf32>, vector<32x256xf32>, vector<32x256xf32>, vector<32x256xf32>, vector<32x256xf32>, vector<32x256xf32>, vector<32x256xf32>, vector<32x256xf32> -> vector<288x256xf32>
    %c0_32 = arith.constant 0 : index
    %c0_33 = arith.constant 0 : index
    %75 = vector.load %arg2[%c0_32, %c0_33] : memref<64x288xf32, #tpu.memory_space<vmem>>, vector<64x288xf32>
    %cst_34 = arith.constant dense<0.000000e+00> : vector<64x256xf32>
    %76 = tpu.matmul %75, %74, %cst_34 {dimension_numbers = #tpu.dot_dimension_numbers<[1], [0], [0], [1], [0, 0, 1, 1], [], []>} : vector<64x288xf32>, vector<288x256xf32>, vector<64x256xf32> -> vector<64x256xf32>
    %c0_35 = arith.constant 0 : index
    %c0_36 = arith.constant 0 : index
    %77 = vector.load %arg3[%c0_35, %c0_36] : memref<64x1xf32, #tpu.memory_space<vmem>>, vector<64x1xf32>
    %78 = vector.broadcast %77 : vector<64x1xf32> to vector<64x256xf32>
    %79 = arith.addf %76, %78 : vector<64x256xf32>
    %c0_37 = arith.constant 0 : index
    %c0_38 = arith.constant 0 : index
    %80 = vector.load %arg4[%c0_37, %c0_38] : memref<64x256xf32, #tpu.memory_space<vmem>>, vector<64x256xf32>
    tpu.vector_store %arg4[%c0_37, %c0_38], %79 {strides = array<i32>} : memref<64x256xf32, #tpu.memory_space<vmem>>, vector<64x256xf32>,
    return
  }
  func.func @transform_0(%arg0: i32) -> (i32, i32) {
    %c0_i32 = arith.constant 0 : i32
    %c0_i32_0 = arith.constant 0 : i32
    return %arg0, %c0_i32 : i32, i32
  }
  func.func @transform_1(%arg0: i32) -> (i32, i32) {
    %c0_i32 = arith.constant 0 : i32
    %c0_i32_0 = arith.constant 0 : i32
    %c0_i32_1 = arith.constant 0 : i32
    return %c0_i32, %c0_i32_0 : i32, i32
  }
  func.func @transform_2(%arg0: i32) -> (i32, i32) {
    %c0_i32 = arith.constant 0 : i32
    %c0_i32_0 = arith.constant 0 : i32
    %c0_i32_1 = arith.constant 0 : i32
    return %c0_i32, %c0_i32_0 : i32, i32
  }
  func.func @transform_3(%arg0: i32) -> (i32, i32) {
    %c0_i32 = arith.constant 0 : i32
    %c0_i32_0 = arith.constant 0 : i32
    return %arg0, %c0_i32 : i32, i32
  }
}

</mosaic_0001>

<llo_original>
// kernel: tpu_custom_call.1
$region0: #{tpu_custom_call.1}
  #allocation0 [shape = 'u32[]', space=smem, size = 0x4, offset = 0x4, fixed_abs, tag = 'smem constant byte address 0x4 - core index']
  #allocation1 [shape = 'u32[144,128]{1,0:T(1,128)}', space=vmem, size = 0x12000, scoped, tag = 'internal scratch']
  #allocation2 [shape = 'f32[32,512]{1,0:T(8,128)}', space=vmem, size = 0x10000, scoped, tag = 'scratch operand']
  %s0 = inlined_call_operand.hbm [shape: f32[64,256], index: 0, kind: input, shape index: {}]
  %s1 = inlined_call_operand.hbm [shape: f32[64,288], index: 1, kind: input, shape index: {}]
  %s2 = inlined_call_operand.vmem [shape: f32[64,1], index: 2, kind: input, shape index: {}]
  %s3 = inlined_call_operand.hbm [shape: f32[128,256], index: 3, kind: output, shape index: {}]
  %s4 = sld [smem:[#allocation0]]
  $region53: #{tpu_custom_call.1} parent=0
    _
  %s6 = ssub.s32 1, %s4
  %s7 = scalar_select 0, %s6, %s4
  $region1: #{tpu_custom_call.1} parent=0
    #allocation3 [shape = 'u8[65536]{0}', space=vmem, size = 0x10000, scoped, tag = 'input window, operand 0']
    #allocation4 [shape = 's32[2]{0}', space=sflag, size = 0x8, scoped, tag = 'scoped memory for tpu_custom_call.1']
    #allocation5 [shape = 's32[2]{0}', space=sflag, size = 0x8, scoped, tag = 'scoped memory for tpu_custom_call.1']
    #allocation6 [shape = 'u8[98304]{0}', space=vmem, size = 0x18000, scoped, tag = 'input window, operand 1, single buffered']
    #allocation7 [shape = 's32[1]{0}', space=sflag, size = 0x4, scoped, tag = 'scoped memory for tpu_custom_call.1']
    #allocation8 [shape = 'u8[131072]{0}', space=vmem, size = 0x20000, scoped, tag = 'output window, operand 0']
    %8 = vsyncpa [#allocation4], 0
    %s9 = scalar_lea.sflag [#allocation4], 1
    %10 = vsyncpa %s9, 0
    %11 = vsyncpa [#allocation7], 0
    %12 = vsyncpa [#allocation5], 0
    %s13 = scalar_lea.sflag [#allocation5], 1
    %14 = vsyncpa %s13, 0
    loop: start=0, step=1, limit=4
    $region2: #{tpu_custom_call.1} parent=1 // loop_pre_header
      _
    $region3: #{tpu_custom_call.1} parent=1 // loop_header
      %s16 = sphi 0, %s20
      %p17 = scmp.ge.s32.totalorder %s16, 4
      %s26 = sphi 0, %s28
      %s29 = sphi 0, %s26
      %s30 = sphi 0, %s29
      %s46 = sphi 0, %s30
      %s50 = sphi 0, %s50
      %s52 = sphi 0, %s50
      %s53 = sphi 0, %s52
      %s67 = sphi 0, %s53
      %s71 = sphi 0, %s71
      %s73 = sphi 0, %s71
      %s74 = sphi 0, %s73
      %s88 = sphi 0, %s74
      %s94 = sphi 0, %s96
      %s97 = sphi 0, %s94
      %s98 = sphi 0, %s97
      %s114 = sphi 0, %s98
    $region4: #{tpu_custom_call.1} parent=1 // loop_header_branch
      %19 = sbr.rel (%p17) target = $region8
    $region5: #{tpu_custom_call.1} parent=1 // loop_body
      %s21 = ssub.s32 %s16, 1
      %s22 = ssub.s32 %s16, 2
      %s23 = sadd.s32 %s16, 1
      %s24 = ssub.s32 %s16, %s23
      %p25 = scmp.eq.s32.totalorder %s24, 0
      %s27 = sadd.s32 %s26, 1
      %s28 = scalar_select %p25, %s26, %s27
      %p31 = pneg %p25
      %p32 = scmp.eq.s32.totalorder %s16, 1
      %p33 = por %p31, %p32
      %p34 = scmp.ne.s32.totalorder %s26, %s29
      %p35 = scmp.eq.s32.totalorder %s16, 0
      %p36 = por %p34, %p35
      %p37 = scmp.ne.s32.totalorder %s26, %s29
      %p38 = scmp.eq.s32.totalorder %s21, 1
      %p39 = por %p37, %p38
      %p40 = scmp.ne.s32.totalorder %s29, %s30
      %p41 = scmp.eq.s32.totalorder %s21, 0
      %p42 = por %p40, %p41
      %p43 = scmp.ne.s32.totalorder %s29, %s30
      %p44 = scmp.eq.s32.totalorder %s22, 1
      %p45 = por %p43, %p44
      %p47 = scmp.ne.s32.totalorder %s30, %s46
      %p48 = scmp.eq.s32.totalorder %s22, 0
      %p49 = por %p47, %p48
      %s51 = sadd.s32 %s50, 1
      %p54 = scmp.eq.s32.totalorder %s16, 1
      %p55 = scmp.ne.s32.totalorder %s50, %s52
      %p56 = scmp.eq.s32.totalorder %s16, 0
      %p57 = por %p55, %p56
      %p58 = scmp.ne.s32.totalorder %s50, %s52
      %p59 = scmp.eq.s32.totalorder %s21, 1
      %p60 = por %p58, %p59
      %p61 = scmp.ne.s32.totalorder %s52, %s53
      %p62 = scmp.eq.s32.totalorder %s21, 0
      %p63 = por %p61, %p62
      %p64 = scmp.ne.s32.totalorder %s52, %s53
      %p65 = scmp.eq.s32.totalorder %s22, 1
      %p66 = por %p64, %p65
      %p68 = scmp.ne.s32.totalorder %s53, %s67
      %p69 = scmp.eq.s32.totalorder %s22, 0
      %p70 = por %p68, %p69
      %s72 = sadd.s32 %s71, 1
      %p75 = scmp.eq.s32.totalorder %s16, 1
      %p76 = scmp.ne.s32.totalorder %s71, %s73
      %p77 = scmp.eq.s32.totalorder %s16, 0
      %p78 = por %p76, %p77
      %p79 = scmp.ne.s32.totalorder %s71, %s73
      %p80 = scmp.eq.s32.totalorder %s21, 1
      %p81 = por %p79, %p80
      %p82 = scmp.ne.s32.totalorder %s73, %s74
      %p83 = scmp.eq.s32.totalorder %s21, 0
      %p84 = por %p82, %p83
      %p85 = scmp.ne.s32.totalorder %s73, %s74
      %p86 = scmp.eq.s32.totalorder %s22, 1
      %p87 = por %p85, %p86
      %p89 = scmp.ne.s32.totalorder %s74, %s88
      %p90 = scmp.eq.s32.totalorder %s22, 0
      %p91 = por %p89, %p90
      %s92 = ssub.s32 %s16, %s23
      %p93 = scmp.eq.s32.totalorder %s92, 0
      %s95 = sadd.s32 %s94, 1
      %s96 = scalar_select %p93, %s94, %s95
      %p99 = pneg %p93
      %p100 = scmp.eq.s32.totalorder %s16, 1
      %p101 = por %p99, %p100
      %p102 = scmp.ne.s32.totalorder %s94, %s97
      %p103 = scmp.eq.s32.totalorder %s16, 0
      %p104 = por %p102, %p103
      %p105 = scmp.ne.s32.totalorder %s94, %s97
      %p106 = scmp.eq.s32.totalorder %s21, 1
      %p107 = por %p105, %p106
      %p108 = scmp.ne.s32.totalorder %s97, %s98
      %p109 = scmp.eq.s32.totalorder %s21, 0
      %p110 = por %p108, %p109
      %p111 = scmp.ne.s32.totalorder %s97, %s98
      %p112 = scmp.eq.s32.totalorder %s22, 1
      %p113 = por %p111, %p112
      %p115 = scmp.ne.s32.totalorder %s98, %s114
      %p116 = scmp.eq.s32.totalorder %s22, 0
      %p117 = por %p115, %p116
      %p118 = scmp.le.s32.totalorder 1, %s16
      %p119 = scmp.lt.s32.totalorder %s16, 3
      %p120 = pnand %p118, %p119
      %p121 = pneg %p120
      // Predicated region
      $region9: #{tpu_custom_call.1} parent=5 // pred_check
        _
      $region10: #{tpu_custom_call.1} parent=5 // pred_check_branch
        %123 = sbr.rel (%p120) target = $region12
      $region11: #{tpu_custom_call.1} parent=5 // pred_region
        %s124 = ssub.s32 %s16, 1
        // Predicated region
        $region13: #{tpu_custom_call.1} parent=11 // pred_check
          %p125 = pneg %p63
        $region14: #{tpu_custom_call.1} parent=11 // pred_check_branch
          %127 = sbr.rel (%p125) target = $region16
        $region15: #{tpu_custom_call.1} parent=11 // pred_region
          %s129 = ssub.s32 3072, 3072
          %130 = vsyncadd [#allocation7], %s129
          %s131 = sshll.u32 [#allocation6], 4
          %s132 = int_to_ptr.vmem [resolvable:$true] %s131
          %137 = dma.hbm_to_vmem [thread:$0]  %s1, 3072, %s132, [#allocation7], 384, 384, 24
        $region16: #{tpu_custom_call.1} parent=11 // pred_fallthru
          _
        // Predicated region
        $region17: #{tpu_custom_call.1} parent=11 // pred_check
          %p138 = pneg %p84
        $region18: #{tpu_custom_call.1} parent=11 // pred_check_branch
          %140 = sbr.rel (%p138) target = $region20
        $region19: #{tpu_custom_call.1} parent=11 // pred_region
          _
        $region20: #{tpu_custom_call.1} parent=11 // pred_fallthru
          _
      $region12: #{tpu_custom_call.1} parent=5 // pred_fallthru
        _
      %p141 = scmp.lt.s32.totalorder %s16, 2
      // Predicated region
      $region21: #{tpu_custom_call.1} parent=5 // pred_check
        %p142 = pneg %p141
      $region22: #{tpu_custom_call.1} parent=5 // pred_check_branch
        %144 = sbr.rel (%p142) target = $region24
      $region23: #{tpu_custom_call.1} parent=5 // pred_region
        // Predicated region
        $region25: #{tpu_custom_call.1} parent=23 // pred_check
          %p145 = pneg %p36
        $region26: #{tpu_custom_call.1} parent=23 // pred_check_branch
          %147 = sbr.rel (%p145) target = $region28
        $region27: #{tpu_custom_call.1} parent=23 // pred_region
          %s148 = sand.u32 %s26, 1
          %s149 = scalar_lea.sflag [#allocation4], %s148
          %s150 = sand.u32 %s26, 1
          %s151 = smul.addr %s150, 64
          %s152 = scalar_lea.vmem [#allocation3], %s151
          %s153 = smul.u32 4, %s16
          %s155 = ssub.s32 1024, 1024
          %156 = vsyncadd %s149, %s155
          %s157 = smul.addr %s153, 2
          %s158 = smul.addr %s157, 128
          %s159 = scalar_lea.hbm %s0, %s158
          %s160 = sshll.u32 %s152, 4
          %s161 = int_to_ptr.vmem [resolvable:$true] %s160
          %166 = dma.hbm_to_vmem [thread:$0]  %s159, 1024, %s161, %s149, 256, 256, 16
        $region28: #{tpu_custom_call.1} parent=23 // pred_fallthru
          _
      $region24: #{tpu_custom_call.1} parent=5 // pred_fallthru
        _
      %p167 = scmp.le.s32.totalorder 1, %s16
      %p168 = scmp.lt.s32.totalorder %s16, 3
      %p169 = pnand %p167, %p168
      %p170 = pneg %p169
      // Predicated region
      $region29: #{tpu_custom_call.1} parent=5 // pred_check
        _
      $region30: #{tpu_custom_call.1} parent=5 // pred_check_branch
        %172 = sbr.rel (%p169) target = $region32
      $region31: #{tpu_custom_call.1} parent=5 // pred_region
        %s173 = ssub.s32 %s16, 1
        %s174 = sand.u32 %s29, 1
        %s175 = scalar_lea.sflag [#allocation4], %s174
        %s176 = sand.u32 %s29, 1
        %s177 = smul.addr %s176, 64
        %s178 = scalar_lea.vmem [#allocation3], %s177
        // Predicated region
        $region33: #{tpu_custom_call.1} parent=31 // pred_check
          %p179 = pneg %p42
        $region34: #{tpu_custom_call.1} parent=31 // pred_check_branch
          %181 = sbr.rel (%p179) target = $region36
        $region35: #{tpu_custom_call.1} parent=31 // pred_region
          %182 = dma.done %s175, 1024
        $region36: #{tpu_custom_call.1} parent=31 // pred_fallthru
          _
        // Predicated region
        $region37: #{tpu_custom_call.1} parent=31 // pred_check
          %p183 = pneg %p63
        $region38: #{tpu_custom_call.1} parent=31 // pred_check_branch
          %185 = sbr.rel (%p183) target = $region40
        $region39: #{tpu_custom_call.1} parent=31 // pred_region
          %186 = dma.done [#allocation7], 3072
        $region40: #{tpu_custom_call.1} parent=31 // pred_fallthru
          _
        %s187 = sand.u32 %s29, 1
        %s188 = scalar_lea.sflag [#allocation4], %s187
        %s189 = sand.u32 %s29, 1
        %s190 = smul.addr %s189, 64
        %s191 = scalar_lea.vmem [#allocation3], %s190
        %p192 = pneg %p42
        %p193 = pneg %p39
        %p194 = pneg %p63
        %p195 = pneg %p60
        %p196 = pneg %p84
        %p197 = pneg %p81
        %p198 = pneg %p110
        %p199 = pneg %p107
        %s200 = sand.u32 %s97, 1
        %s201 = scalar_lea.sflag [#allocation5], %s200
        %s202 = sand.u32 %s97, 1
        %s203 = smul.addr %s202, 128
        %s204 = scalar_lea.vmem [#allocation8], %s203
        %s205 = smul.u32 4, %s21
        %s206 = smul.u32 8, %s21
        %207 = vst [vmem:[#allocation2] sm:$0xff] 0.0
        %208 = vst [vmem:[#allocation2 + $0x20] sm:$0xff] 0.0
        %209 = vst [vmem:[#allocation2 + $0x40] sm:$0xff] 0.0
        %210 = vst [vmem:[#allocation2 + $0x60] sm:$0xff] 0.0
        %211 = vst [vmem:[#allocation2 + $0x18] sm:$0xff] 0.0
        %212 = vst [vmem:[#allocation2 + $0x38] sm:$0xff] 0.0
        %213 = vst [vmem:[#allocation2 + $0x58] sm:$0xff] 0.0
        %214 = vst [vmem:[#allocation2 + $0x78] sm:$0xff] 0.0
        %v215 = vld [vmem:[%s178] sm:$0xff]
        %v216 = vld [vmem:[%s178 + $0x8] sm:$0xff]
        %v217 = vld [vmem:[%s178 + $0x10] sm:$0xff]
        %v218 = vld [vmem:[%s178 + $0x18] sm:$0xff]
        %v219 = vld [vmem:[%s178 + $0x20] sm:$0xff]
        %v220 = vld [vmem:[%s178 + $0x28] sm:$0xff]
        %v221 = vld [vmem:[%s178 + $0x30] sm:$0xff]
        %v222 = vld [vmem:[%s178 + $0x38] sm:$0xff]
        %223 = vst [vmem:[#allocation2 + $0x8] sm:$0xff] %v215
        %224 = vst [vmem:[#allocation2 + $0x10] sm:$0xff] %v216
        %225 = vst [vmem:[#allocation2 + $0x28] sm:$0xff] %v217
        %226 = vst [vmem:[#allocation2 + $0x30] sm:$0xff] %v218
        %227 = vst [vmem:[#allocation2 + $0x48] sm:$0xff] %v219
        %228 = vst [vmem:[#allocation2 + $0x50] sm:$0xff] %v220
        %229 = vst [vmem:[#allocation2 + $0x68] sm:$0xff] %v221
        %230 = vst [vmem:[#allocation2 + $0x70] sm:$0xff] %v222
        %v231 = vlaneseq
        %v232 = vand.u32 %v231, 127
        %v233 = vadd.s32 %v232, 128
        %vm234 = vcmp.lt.s32.totalorder %v232, 0
        %v235 = vsub.s32 0, %v232
        %v236 = vsel %vm234, %v235, %v232
        %v237 = vshrl.u32 %v236, 4
        %v238 = vand.u32 %v236, 15
        %v239 = vsub.s32 0, %v238
        %v240 = vsel %vm234, %v239, %v238
        %vm241 = vcmp.lt.s32.totalorder %v233, 0
        %v242 = vsub.s32 0, %v233
        %v243 = vsel %vm241, %v242, %v233
        %v244 = vshrl.u32 %v243, 4
        %v245 = vand.u32 %v243, 15
        %v246 = vsub.s32 0, %v245
        %v247 = vsel %vm241, %v246, %v245
        %vm248 = vcmp.ne.s32.totalorder %v240, 0
        %vm249 = vcmp.ne.s32.totalorder %v247, 0
        %vm250 = vcmp.lt.s32.totalorder %v240, 0
        %vm251 = vcmp.lt.s32.totalorder %v247, 0
        %vm252 = vmand %vm250, %vm248
        %vm253 = vmand %vm251, %vm249
        %v254 = vadd.s32 %v240, 16
        %v255 = vadd.s32 %v247, 16
        %v256 = vsel %vm252, %v254, %v240
        %v257 = vsel %vm253, %v255, %v247
        %v258 = vadd.s32 %v256, 4294967295
        %v259 = vadd.s32 %v257, 4294967295
        %vm260 = vcmp.ge.s32.totalorder %v258, 0
        %vm261 = vcmp.ge.s32.totalorder %v259, 0
        %vm262 = vcmp.lt.s32.totalorder %v258, 16
        %vm263 = vcmp.lt.s32.totalorder %v259, 16
        %vm264 = vmand %vm260, %vm262
        %vm265 = vmand %vm261, %vm263
        %v266 = vadd.s32 %v256, 1
        %v267 = vadd.s32 %v257, 1
        %vm268 = vcmp.ge.s32.totalorder %v266, 0
        %vm269 = vcmp.ge.s32.totalorder %v267, 0
        %vm270 = vcmp.lt.s32.totalorder %v266, 16
        %vm271 = vcmp.lt.s32.totalorder %v267, 16
        %vm272 = vmand %vm268, %vm270
        %vm273 = vmand %vm269, %vm271
        %v274 = vld [vmem:[#allocation2] sm:$0xff]
        %v275 = vld [vmem:[#allocation2 + $0x8] sm:$0xff]
        %v276 = vld [vmem:[#allocation2 + $0x10] sm:$0xff]
        %v277 = vld [vmem:[#allocation2 + $0x20] sm:$0xff]
        %v278 = vld [vmem:[#allocation2 + $0x28] sm:$0xff]
        %v279 = vld [vmem:[#allocation2 + $0x30] sm:$0xff]
        %v280 = vld [vmem:[#allocation2 + $0x40] sm:$0xff]
        %v281 = vld [vmem:[#allocation2 + $0x48] sm:$0xff]
        %v282 = vld [vmem:[#allocation2 + $0x50] sm:$0xff]
        %v283 = vld [vmem:[#allocation2 + $0x60] sm:$0xff]
        %v284 = vld [vmem:[#allocation2 + $0x68] sm:$0xff]
        %v285 = vld [vmem:[#allocation2 + $0x70] sm:$0xff]
        %v286 = vsel %vm264, 1, 0
        %v287 = vsel %vm265, 1, 0
        %vm288 = vcmp.eq.s32.totalorder %v286, 1
        %vm289 = vcmp.eq.s32.totalorder %v287, 1
        %302 = vrot.lane.b32.xlu0 %v274, 17
        %v303 = vpop.permute.xlu0 %302
        %304 = vrot.lane.b32.xlu0 %v275, 17
        %v305 = vpop.permute.xlu0 %304
        %306 = vrot.lane.b32.xlu0 %v276, 17
        %v307 = vpop.permute.xlu0 %306
        %308 = vrot.lane.b32.xlu0 %v277, 17
        %v309 = vpop.permute.xlu0 %308
        %310 = vrot.lane.b32.xlu0 %v278, 17
        %v311 = vpop.permute.xlu0 %310
        %312 = vrot.lane.b32.xlu0 %v279, 17
        %v313 = vpop.permute.xlu0 %312
        %314 = vrot.lane.b32.xlu0 %v280, 17
        %v315 = vpop.permute.xlu0 %314
        %316 = vrot.lane.b32.xlu0 %v281, 17
        %v317 = vpop.permute.xlu0 %316
        %318 = vrot.lane.b32.xlu0 %v282, 17
        %v319 = vpop.permute.xlu0 %318
        %320 = vrot.lane.b32.xlu0 %v283, 17
        %v321 = vpop.permute.xlu0 %320
        %322 = vrot.lane.b32.xlu0 %v284, 17
        %v323 = vpop.permute.xlu0 %322
        %324 = vrot.lane.b32.xlu0 %v285, 17
        %v325 = vpop.permute.xlu0 %324
        %vm326 = vcmask 138240
        %v327 = vsel %vm326, %v303, %v305
        %v328 = vsel %vm326, %v305, %v307
        %v329 = vsel %vm326, %v309, %v311
        %v330 = vsel %vm326, %v311, %v313
        %v331 = vsel %vm326, %v315, %v317
        %v332 = vsel %vm326, %v317, %v319
        %v333 = vsel %vm326, %v321, %v323
        %v334 = vsel %vm326, %v323, %v325
        %v343 = vsel %vm288, %v327, 0.0
        %v344 = vsel %vm289, %v328, 0.0
        %v345 = vsel %vm288, %v329, 0.0
        %v346 = vsel %vm289, %v330, 0.0
        %v347 = vsel %vm288, %v331, 0.0
        %v348 = vsel %vm289, %v332, 0.0
        %v349 = vsel %vm288, %v333, 0.0
        %v350 = vsel %vm289, %v334, 0.0
        %v351 = vsel %vm272, 1, 0
        %v352 = vsel %vm273, 1, 0
        %vm353 = vcmp.eq.s32.totalorder %v351, 1
        %vm354 = vcmp.eq.s32.totalorder %v352, 1
        %355 = vrot.lane.b32.xlu0 %v274, 15
        %v356 = vpop.permute.xlu0 %355
        %357 = vrot.lane.b32.xlu0 %v275, 15
        %v358 = vpop.permute.xlu0 %357
        %359 = vrot.lane.b32.xlu0 %v276, 15
        %v360 = vpop.permute.xlu0 %359
        %361 = vrot.lane.b32.xlu0 %v277, 15
        %v362 = vpop.permute.xlu0 %361
        %363 = vrot.lane.b32.xlu0 %v278, 15
        %v364 = vpop.permute.xlu0 %363
        %365 = vrot.lane.b32.xlu0 %v279, 15
        %v366 = vpop.permute.xlu0 %365
        %367 = vrot.lane.b32.xlu0 %v280, 15
        %v368 = vpop.permute.xlu0 %367
        %369 = vrot.lane.b32.xlu0 %v281, 15
        %v370 = vpop.permute.xlu0 %369
        %371 = vrot.lane.b32.xlu0 %v282, 15
        %v372 = vpop.permute.xlu0 %371
        %373 = vrot.lane.b32.xlu0 %v283, 15
        %v374 = vpop.permute.xlu0 %373
        %375 = vrot.lane.b32.xlu0 %v284, 15
        %v376 = vpop.permute.xlu0 %375
        %377 = vrot.lane.b32.xlu0 %v285, 15
        %v378 = vpop.permute.xlu0 %377
        %vm379 = vcmask 121856
        %v380 = vsel %vm379, %v356, %v358
        %v381 = vsel %vm379, %v358, %v360
        %v382 = vsel %vm379, %v362, %v364
        %v383 = vsel %vm379, %v364, %v366
        %v384 = vsel %vm379, %v368, %v370
        %v385 = vsel %vm379, %v370, %v372
        %v386 = vsel %vm379, %v374, %v376
        %v387 = vsel %vm379, %v376, %v378
        %v396 = vsel %vm353, %v380, 0.0
        %v397 = vsel %vm354, %v381, 0.0
        %v398 = vsel %vm353, %v382, 0.0
        %v399 = vsel %vm354, %v383, 0.0
        %v400 = vsel %vm353, %v384, 0.0
        %v401 = vsel %vm354, %v385, 0.0
        %v402 = vsel %vm353, %v386, 0.0
        %v403 = vsel %vm354, %v387, 0.0
        %404 = vrot.lane.b32.xlu0 %v274, 1
        %v405 = vpop.permute.xlu0 %404
        %406 = vrot.lane.b32.xlu0 %v275, 1
        %v407 = vpop.permute.xlu0 %406
        %408 = vrot.lane.b32.xlu0 %v276, 1
        %v409 = vpop.permute.xlu0 %408
        %410 = vrot.lane.b32.xlu0 %v277, 1
        %v411 = vpop.permute.xlu0 %410
        %412 = vrot.lane.b32.xlu0 %v278, 1
        %v413 = vpop.permute.xlu0 %412
        %414 = vrot.lane.b32.xlu0 %v279, 1
        %v415 = vpop.permute.xlu0 %414
        %416 = vrot.lane.b32.xlu0 %v280, 1
        %v417 = vpop.permute.xlu0 %416
        %418 = vrot.lane.b32.xlu0 %v281, 1
        %v419 = vpop.permute.xlu0 %418
        %420 = vrot.lane.b32.xlu0 %v282, 1
        %v421 = vpop.permute.xlu0 %420
        %422 = vrot.lane.b32.xlu0 %v283, 1
        %v423 = vpop.permute.xlu0 %422
        %424 = vrot.lane.b32.xlu0 %v284, 1
        %v425 = vpop.permute.xlu0 %424
        %426 = vrot.lane.b32.xlu0 %v285, 1
        %v427 = vpop.permute.xlu0 %426
        %vm428 = vcmask 7168
        %v429 = vsel %vm428, %v405, %v407
        %v430 = vsel %vm428, %v407, %v409
        %v431 = vsel %vm428, %v411, %v413
        %v432 = vsel %vm428, %v413, %v415
        %v433 = vsel %vm428, %v417, %v419
        %v434 = vsel %vm428, %v419, %v421
        %v435 = vsel %vm428, %v423, %v425
        %v436 = vsel %vm428, %v425, %v427
        %v445 = vsel %vm288, %v429, 0.0
        %v446 = vsel %vm289, %v430, 0.0
        %v447 = vsel %vm288, %v431, 0.0
        %v448 = vsel %vm289, %v432, 0.0
        %v449 = vsel %vm288, %v433, 0.0
        %v450 = vsel %vm289, %v434, 0.0
        %v451 = vsel %vm288, %v435, 0.0
        %v452 = vsel %vm289, %v436, 0.0
        %v453 = vld [vmem:[#allocation2 + $0x8] sm:$0xff]
        %v454 = vld [vmem:[#allocation2 + $0x10] sm:$0xff]
        %v455 = vld [vmem:[#allocation2 + $0x18] sm:$0xff]
        %v456 = vld [vmem:[#allocation2 + $0x28] sm:$0xff]
        %v457 = vld [vmem:[#allocation2 + $0x30] sm:$0xff]
        %v458 = vld [vmem:[#allocation2 + $0x38] sm:$0xff]
        %v459 = vld [vmem:[#allocation2 + $0x48] sm:$0xff]
        %v460 = vld [vmem:[#allocation2 + $0x50] sm:$0xff]
        %v461 = vld [vmem:[#allocation2 + $0x58] sm:$0xff]
        %v462 = vld [vmem:[#allocation2 + $0x68] sm:$0xff]
        %v463 = vld [vmem:[#allocation2 + $0x70] sm:$0xff]
        %v464 = vld [vmem:[#allocation2 + $0x78] sm:$0xff]
        %477 = vrot.lane.b32.xlu0 %v453, 127
        %v478 = vpop.permute.xlu0 %477
        %479 = vrot.lane.b32.xlu0 %v454, 127
        %v480 = vpop.permute.xlu0 %479
        %481 = vrot.lane.b32.xlu0 %v455, 127
        %v482 = vpop.permute.xlu0 %481
        %483 = vrot.lane.b32.xlu0 %v456, 127
        %v484 = vpop.permute.xlu0 %483
        %485 = vrot.lane.b32.xlu0 %v457, 127
        %v486 = vpop.permute.xlu0 %485
        %487 = vrot.lane.b32.xlu0 %v458, 127
        %v488 = vpop.permute.xlu0 %487
        %489 = vrot.lane.b32.xlu0 %v459, 127
        %v490 = vpop.permute.xlu0 %489
        %491 = vrot.lane.b32.xlu0 %v460, 127
        %v492 = vpop.permute.xlu0 %491
        %493 = vrot.lane.b32.xlu0 %v461, 127
        %v494 = vpop.permute.xlu0 %493
        %495 = vrot.lane.b32.xlu0 %v462, 127
        %v496 = vpop.permute.xlu0 %495
        %497 = vrot.lane.b32.xlu0 %v463, 127
        %v498 = vpop.permute.xlu0 %497
        %499 = vrot.lane.b32.xlu0 %v464, 127
        %v500 = vpop.permute.xlu0 %499
        %vm501 = vcmask 1039360
        %v502 = vsel %vm501, %v478, %v480
        %v503 = vsel %vm501, %v480, %v482
        %v504 = vsel %vm501, %v484, %v486
        %v505 = vsel %vm501, %v486, %v488
        %v506 = vsel %vm501, %v490, %v492
        %v507 = vsel %vm501, %v492, %v494
        %v508 = vsel %vm501, %v496, %v498
        %v509 = vsel %vm501, %v498, %v500
        %v518 = vsel %vm353, %v502, 0.0
        %v519 = vsel %vm354, %v503, 0.0
        %v520 = vsel %vm353, %v504, 0.0
        %v521 = vsel %vm354, %v505, 0.0
        %v522 = vsel %vm353, %v506, 0.0
        %v523 = vsel %vm354, %v507, 0.0
        %v524 = vsel %vm353, %v508, 0.0
        %v525 = vsel %vm354, %v509, 0.0
        %526 = vrot.lane.b32.xlu0 %v453, 113
        %v527 = vpop.permute.xlu0 %526
        %528 = vrot.lane.b32.xlu0 %v454, 113
        %v529 = vpop.permute.xlu0 %528
        %530 = vrot.lane.b32.xlu0 %v455, 113
        %v531 = vpop.permute.xlu0 %530
        %532 = vrot.lane.b32.xlu0 %v456, 113
        %v533 = vpop.permute.xlu0 %532
        %534 = vrot.lane.b32.xlu0 %v457, 113
        %v535 = vpop.permute.xlu0 %534
        %536 = vrot.lane.b32.xlu0 %v458, 113
        %v537 = vpop.permute.xlu0 %536
        %538 = vrot.lane.b32.xlu0 %v459, 113
        %v539 = vpop.permute.xlu0 %538
        %540 = vrot.lane.b32.xlu0 %v460, 113
        %v541 = vpop.permute.xlu0 %540
        %542 = vrot.lane.b32.xlu0 %v461, 113
        %v543 = vpop.permute.xlu0 %542
        %544 = vrot.lane.b32.xlu0 %v462, 113
        %v545 = vpop.permute.xlu0 %544
        %546 = vrot.lane.b32.xlu0 %v463, 113
        %v547 = vpop.permute.xlu0 %546
        %548 = vrot.lane.b32.xlu0 %v464, 113
        %v549 = vpop.permute.xlu0 %548
        %vm550 = vcmask 924672
        %v551 = vsel %vm550, %v527, %v529
        %v552 = vsel %vm550, %v529, %v531
        %v553 = vsel %vm550, %v533, %v535
        %v554 = vsel %vm550, %v535, %v537
        %v555 = vsel %vm550, %v539, %v541
        %v556 = vsel %vm550, %v541, %v543
        %v557 = vsel %vm550, %v545, %v547
        %v558 = vsel %vm550, %v547, %v549
        %v567 = vsel %vm288, %v551, 0.0
        %v568 = vsel %vm289, %v552, 0.0
        %v569 = vsel %vm288, %v553, 0.0
        %v570 = vsel %vm289, %v554, 0.0
        %v571 = vsel %vm288, %v555, 0.0
        %v572 = vsel %vm289, %v556, 0.0
        %v573 = vsel %vm288, %v557, 0.0
        %v574 = vsel %vm289, %v558, 0.0
        %575 = vrot.lane.b32.xlu0 %v453, 111
        %v576 = vpop.permute.xlu0 %575
        %577 = vrot.lane.b32.xlu0 %v454, 111
        %v578 = vpop.permute.xlu0 %577
        %579 = vrot.lane.b32.xlu0 %v455, 111
        %v580 = vpop.permute.xlu0 %579
        %581 = vrot.lane.b32.xlu0 %v456, 111
        %v582 = vpop.permute.xlu0 %581
        %583 = vrot.lane.b32.xlu0 %v457, 111
        %v584 = vpop.permute.xlu0 %583
        %585 = vrot.lane.b32.xlu0 %v458, 111
        %v586 = vpop.permute.xlu0 %585
        %587 = vrot.lane.b32.xlu0 %v459, 111
        %v588 = vpop.permute.xlu0 %587
        %589 = vrot.lane.b32.xlu0 %v460, 111
        %v590 = vpop.permute.xlu0 %589
        %591 = vrot.lane.b32.xlu0 %v461, 111
        %v592 = vpop.permute.xlu0 %591
        %593 = vrot.lane.b32.xlu0 %v462, 111
        %v594 = vpop.permute.xlu0 %593
        %595 = vrot.lane.b32.xlu0 %v463, 111
        %v596 = vpop.permute.xlu0 %595
        %597 = vrot.lane.b32.xlu0 %v464, 111
        %v598 = vpop.permute.xlu0 %597
        %vm599 = vcmask 908288
        %v600 = vsel %vm599, %v576, %v578
        %v601 = vsel %vm599, %v578, %v580
        %v602 = vsel %vm599, %v582, %v584
        %v603 = vsel %vm599, %v584, %v586
        %v604 = vsel %vm599, %v588, %v590
        %v605 = vsel %vm599, %v590, %v592
        %v606 = vsel %vm599, %v594, %v596
        %v607 = vsel %vm599, %v596, %v598
        %v616 = vsel %vm353, %v600, 0.0
        %v617 = vsel %vm354, %v601, 0.0
        %v618 = vsel %vm353, %v602, 0.0
        %v619 = vsel %vm354, %v603, 0.0
        %v620 = vsel %vm353, %v604, 0.0
        %v621 = vsel %vm354, %v605, 0.0
        %v622 = vsel %vm353, %v606, 0.0
        %v623 = vsel %vm354, %v607, 0.0
        %624 = vrot.lane.b32.xlu0 %v274, 16
        %v625 = vpop.permute.xlu0 %624
        %626 = vrot.lane.b32.xlu0 %v275, 16
        %v627 = vpop.permute.xlu0 %626
        %628 = vrot.lane.b32.xlu0 %v276, 16
        %v629 = vpop.permute.xlu0 %628
        %630 = vrot.lane.b32.xlu0 %v277, 16
        %v631 = vpop.permute.xlu0 %630
        %632 = vrot.lane.b32.xlu0 %v278, 16
        %v633 = vpop.permute.xlu0 %632
        %634 = vrot.lane.b32.xlu0 %v279, 16
        %v635 = vpop.permute.xlu0 %634
        %636 = vrot.lane.b32.xlu0 %v280, 16
        %v637 = vpop.permute.xlu0 %636
        %638 = vrot.lane.b32.xlu0 %v281, 16
        %v639 = vpop.permute.xlu0 %638
        %640 = vrot.lane.b32.xlu0 %v282, 16
        %v641 = vpop.permute.xlu0 %640
        %642 = vrot.lane.b32.xlu0 %v283, 16
        %v643 = vpop.permute.xlu0 %642
        %644 = vrot.lane.b32.xlu0 %v284, 16
        %v645 = vpop.permute.xlu0 %644
        %646 = vrot.lane.b32.xlu0 %v285, 16
        %v647 = vpop.permute.xlu0 %646
        %vm648 = vcmask 130048
        %v649 = vsel %vm648, %v625, %v627
        %v650 = vsel %vm648, %v627, %v629
        %v651 = vsel %vm648, %v631, %v633
        %v652 = vsel %vm648, %v633, %v635
        %v653 = vsel %vm648, %v637, %v639
        %v654 = vsel %vm648, %v639, %v641
        %v655 = vsel %vm648, %v643, %v645
        %v656 = vsel %vm648, %v645, %v647
        %665 = vrot.lane.b32.xlu0 %v453, 112
        %v666 = vpop.permute.xlu0 %665
        %667 = vrot.lane.b32.xlu0 %v454, 112
        %v668 = vpop.permute.xlu0 %667
        %669 = vrot.lane.b32.xlu0 %v455, 112
        %v670 = vpop.permute.xlu0 %669
        %671 = vrot.lane.b32.xlu0 %v456, 112
        %v672 = vpop.permute.xlu0 %671
        %673 = vrot.lane.b32.xlu0 %v457, 112
        %v674 = vpop.permute.xlu0 %673
        %675 = vrot.lane.b32.xlu0 %v458, 112
        %v676 = vpop.permute.xlu0 %675
        %677 = vrot.lane.b32.xlu0 %v459, 112
        %v678 = vpop.permute.xlu0 %677
        %679 = vrot.lane.b32.xlu0 %v460, 112
        %v680 = vpop.permute.xlu0 %679
        %681 = vrot.lane.b32.xlu0 %v461, 112
        %v682 = vpop.permute.xlu0 %681
        %683 = vrot.lane.b32.xlu0 %v462, 112
        %v684 = vpop.permute.xlu0 %683
        %685 = vrot.lane.b32.xlu0 %v463, 112
        %v686 = vpop.permute.xlu0 %685
        %687 = vrot.lane.b32.xlu0 %v464, 112
        %v688 = vpop.permute.xlu0 %687
        %vm689 = vcmask 916480
        %v690 = vsel %vm689, %v666, %v668
        %v691 = vsel %vm689, %v668, %v670
        %v692 = vsel %vm689, %v672, %v674
        %v693 = vsel %vm689, %v674, %v676
        %v694 = vsel %vm689, %v678, %v680
        %v695 = vsel %vm689, %v680, %v682
        %v696 = vsel %vm689, %v684, %v686
        %v697 = vsel %vm689, %v686, %v688
        %v706 = vld [vmem:[#allocation6] sm:$0xff]
        %v707 = vld [vmem:[#allocation6 + $0x8] sm:$0xff]
        %v708 = vld [vmem:[#allocation6 + $0x10] sm:$0xff]
        %v709 = vld [vmem:[#allocation6 + $0x18] sm:$0xff]
        %v710 = vld [vmem:[#allocation6 + $0x20] sm:$0xff]
        %v711 = vld [vmem:[#allocation6 + $0x28] sm:$0xff]
        %v712 = vld [vmem:[#allocation6 + $0x30] sm:$0xff]
        %v713 = vld [vmem:[#allocation6 + $0x38] sm:$0xff]
        %v714 = vld [vmem:[#allocation6 + $0x40] sm:$0xff]
        %v715 = vld [vmem:[#allocation6 + $0x48] sm:$0xff]
        %v716 = vld [vmem:[#allocation6 + $0x50] sm:$0xff]
        %v717 = vld [vmem:[#allocation6 + $0x58] sm:$0xff]
        %v718 = vld [vmem:[#allocation6 + $0x60] sm:$0xff]
        %v719 = vld [vmem:[#allocation6 + $0x68] sm:$0xff]
        %v720 = vld [vmem:[#allocation6 + $0x70] sm:$0xff]
        %v721 = vld [vmem:[#allocation6 + $0x78] sm:$0xff]
        %v722 = vld [vmem:[#allocation6 + $0x80] sm:$0xff]
        %v723 = vld [vmem:[#allocation6 + $0x88] sm:$0xff]
        %v724 = vld [vmem:[#allocation6 + $0x90] sm:$0xff]
        %v725 = vld [vmem:[#allocation6 + $0x98] sm:$0xff]
        %v726 = vld [vmem:[#allocation6 + $0xa0] sm:$0xff]
        %v727 = vld [vmem:[#allocation6 + $0xa8] sm:$0xff]
        %v728 = vld [vmem:[#allocation6 + $0xb0] sm:$0xff]
        %v729 = vld [vmem:[#allocation6 + $0xb8] sm:$0xff]
        %v730 = vld [vmem:[%s2] sm:$0xff]
        %v731 = vld [vmem:[%s2 + $0x8] sm:$0xff]
        %v732 = vld [vmem:[%s2 + $0x10] sm:$0xff]
        %v733 = vld [vmem:[%s2 + $0x18] sm:$0xff]
        %v734 = vld [vmem:[%s2 + $0x20] sm:$0xff]
        %v735 = vld [vmem:[%s2 + $0x28] sm:$0xff]
        %v736 = vld [vmem:[%s2 + $0x30] sm:$0xff]
        %v737 = vld [vmem:[%s2 + $0x38] sm:$0xff]
        %739 = vset.pattern.permute.xlu0 0
        %740 = vperm.xlu0 %739, %v730
        %v741 = vpop.permute.xlu0 %740
        %744 = vset.pattern.permute.xlu0 0
        %745 = vperm.xlu0 %744, %v731
        %v746 = vpop.permute.xlu0 %745
        %749 = vset.pattern.permute.xlu0 0
        %750 = vperm.xlu0 %749, %v732
        %v751 = vpop.permute.xlu0 %750
        %754 = vset.pattern.permute.xlu0 0
        %755 = vperm.xlu0 %754, %v733
        %v756 = vpop.permute.xlu0 %755
        %759 = vset.pattern.permute.xlu0 0
        %760 = vperm.xlu0 %759, %v734
        %v761 = vpop.permute.xlu0 %760
        %764 = vset.pattern.permute.xlu0 0
        %765 = vperm.xlu0 %764, %v735
        %v766 = vpop.permute.xlu0 %765
        %769 = vset.pattern.permute.xlu0 0
        %770 = vperm.xlu0 %769, %v736
        %v771 = vpop.permute.xlu0 %770
        %774 = vset.pattern.permute.xlu0 0
        %775 = vperm.xlu0 %774, %v737
        %v776 = vpop.permute.xlu0 %775
        %vm778 = vcmask 261120
        %v780 = vsel %vm778, %v708, 0
        %v783 = vsel %vm778, %v711, 0
        %v786 = vsel %vm778, %v714, 0
        %v789 = vsel %vm778, %v717, 0
        %v792 = vsel %vm778, %v720, 0
        %v795 = vsel %vm778, %v723, 0
        %v798 = vsel %vm778, %v726, 0
        %v801 = vsel %vm778, %v729, 0
        %803 = vmatprep.subr.mxu0 %v452
        %804 = vmatpush1.msra.mxu0 %v451
        %805 = vmatprep.subr.mxu0 %v450
        %806 = vmatpush1.msra.mxu0 %v449
        %807 = vmatprep.subr.mxu0 %v448
        %808 = vmatpush1.msra.mxu0 %v447
        %809 = vmatprep.subr.mxu0 %v446
        %810 = vmatpush1.msra.mxu0 %v445
        %811 = vmatprep.subr.mxu0 %v403
        %812 = vmatpush1.msra.mxu0 %v402
        %813 = vmatprep.subr.mxu0 %v401
        %814 = vmatpush1.msra.mxu0 %v400
        %815 = vmatprep.subr.mxu0 %v399
        %816 = vmatpush1.msra.mxu0 %v398
        %817 = vmatprep.subr.mxu0 %v397
        %818 = vmatpush1.msra.mxu0 %v396
        %819 = vmatprep.subr.mxu0 %v656
        %820 = vmatpush1.msra.mxu0 %v655
        %821 = vmatprep.subr.mxu0 %v654
        %822 = vmatpush1.msra.mxu0 %v653
        %823 = vmatprep.subr.mxu0 %v652
        %824 = vmatpush1.msra.mxu0 %v651
        %825 = vmatprep.subr.mxu0 %v650
        %826 = vmatpush1.msra.mxu0 %v649
        %827 = vmatprep.subr.mxu0 %v350
        %828 = vmatpush1.msra.mxu0 %v349
        %829 = vmatprep.subr.mxu0 %v348
        %830 = vmatpush1.msra.mxu0 %v347
        %831 = vmatprep.subr.mxu0 %v346
        %832 = vmatpush1.msra.mxu0 %v345
        %833 = vmatprep.subr.mxu0 %v344
        %834 = vmatpush1.msra.mxu0 %v343
        %835 = vmatprep.subr.mxu0 %v697
        %836 = vmatpush2.msra.mxu0 %v696
        %837 = vmatprep.subr.mxu0 %v695
        %838 = vmatpush2.msra.mxu0 %v694
        %839 = vmatprep.subr.mxu0 %v693
        %840 = vmatpush2.msra.mxu0 %v692
        %841 = vmatprep.subr.mxu0 %v691
        %842 = vmatpush2.msra.mxu0 %v690
        %843 = vmatprep.subr.mxu0 %v574
        %844 = vmatpush2.msra.mxu0 %v573
        %845 = vmatprep.subr.mxu0 %v572
        %846 = vmatpush2.msra.mxu0 %v571
        %847 = vmatprep.subr.mxu0 %v570
        %848 = vmatpush2.msra.mxu0 %v569
        %849 = vmatprep.subr.mxu0 %v568
        %850 = vmatpush2.msra.mxu0 %v567
        %851 = vmatprep.subr.mxu0 %v525
        %852 = vmatpush2.msra.mxu0 %v524
        %853 = vmatprep.subr.mxu0 %v523
        %854 = vmatpush2.msra.mxu0 %v522
        %855 = vmatprep.subr.mxu0 %v521
        %856 = vmatpush2.msra.mxu0 %v520
        %857 = vmatprep.subr.mxu0 %v519
        %858 = vmatpush2.msra.mxu0 %v518
        %859 = vmatprep.subr.mxu0 %v285
        %860 = vmatpush2.msra.mxu0 %v284
        %861 = vmatprep.subr.mxu0 %v282
        %862 = vmatpush2.msra.mxu0 %v281
        %863 = vmatprep.subr.mxu0 %v279
        %864 = vmatpush2.msra.mxu0 %v278
        %865 = vmatprep.subr.mxu0 %v276
        %866 = vmatpush2.msra.mxu0 %v275
        %867 = vmatprep.mubr.f32.mxu0 %v707
        %868 = vmatmul.mubr.f32.gmra.mxu0 %v706
        %v869 = vpop.f32.mrf.mxu0
        %v870 = vadd.f32 %v741, %v869
        %v871 = vpop.f32.mrf.mxu0
        %v872 = vadd.f32 %v741, %v871
        %873 = vmatprep.mubr.f32.mxu0 %v710
        %874 = vmatmul.mubr.f32.gmra.mxu0 %v709
        %v875 = vpop.f32.mrf.mxu0
        %v876 = vadd.f32 %v746, %v875
        %v877 = vpop.f32.mrf.mxu0
        %v878 = vadd.f32 %v746, %v877
        %879 = vmatprep.mubr.f32.mxu0 %v713
        %880 = vmatmul.mubr.f32.gmra.mxu0 %v712
        %v881 = vpop.f32.mrf.mxu0
        %v882 = vadd.f32 %v751, %v881
        %v883 = vpop.f32.mrf.mxu0
        %v884 = vadd.f32 %v751, %v883
        %885 = vmatprep.mubr.f32.mxu0 %v716
        %886 = vmatmul.mubr.f32.gmra.mxu0 %v715
        %v887 = vpop.f32.mrf.mxu0
        %v888 = vadd.f32 %v756, %v887
        %v889 = vpop.f32.mrf.mxu0
        %v890 = vadd.f32 %v756, %v889
        %891 = vmatprep.mubr.f32.mxu0 %v719
        %892 = vmatmul.mubr.f32.gmra.mxu0 %v718
        %v893 = vpop.f32.mrf.mxu0
        %v894 = vadd.f32 %v761, %v893
        %v895 = vpop.f32.mrf.mxu0
        %v896 = vadd.f32 %v761, %v895
        %897 = vmatprep.mubr.f32.mxu0 %v722
        %898 = vmatmul.mubr.f32.gmra.mxu0 %v721
        %v899 = vpop.f32.mrf.mxu0
        %v900 = vadd.f32 %v766, %v899
        %v901 = vpop.f32.mrf.mxu0
        %v902 = vadd.f32 %v766, %v901
        %903 = vmatprep.mubr.f32.mxu0 %v725
        %904 = vmatmul.mubr.f32.gmra.mxu0 %v724
        %v905 = vpop.f32.mrf.mxu0
        %v906 = vadd.f32 %v771, %v905
        %v907 = vpop.f32.mrf.mxu0
        %v908 = vadd.f32 %v771, %v907
        %909 = vmatprep.mubr.f32.mxu0 %v728
        %910 = vmatmul.mubr.f32.gmra.mxu0 %v727
        %v911 = vpop.f32.mrf.mxu0
        %v912 = vadd.f32 %v776, %v911
        %v913 = vpop.f32.mrf.mxu0
        %v914 = vadd.f32 %v776, %v913
        %915 = vdwg.mxu0
        %916 = vmatprep.subr.mxu0 0.0
        %917 = vmatpush1.msra.mxu0 0.0
        %918 = vmatprep.subr.mxu0 0.0
        %919 = vmatpush1.msra.mxu0 0.0
        %920 = vmatprep.subr.mxu0 0.0
        %921 = vmatpush1.msra.mxu0 0.0
        %922 = vmatprep.subr.mxu0 0.0
        %923 = vmatpush1.msra.mxu0 0.0
        %924 = vmatprep.subr.mxu0 0.0
        %925 = vmatpush1.msra.mxu0 0.0
        %926 = vmatprep.subr.mxu0 0.0
        %927 = vmatpush1.msra.mxu0 0.0
        %928 = vmatprep.subr.mxu0 0.0
        %929 = vmatpush1.msra.mxu0 0.0
        %930 = vmatprep.subr.mxu0 0.0
        %931 = vmatpush1.msra.mxu0 0.0
        %932 = vmatprep.subr.mxu0 0.0
        %933 = vmatpush1.msra.mxu0 0.0
        %934 = vmatprep.subr.mxu0 0.0
        %935 = vmatpush1.msra.mxu0 0.0
        %936 = vmatprep.subr.mxu0 0.0
        %937 = vmatpush1.msra.mxu0 0.0
        %938 = vmatprep.subr.mxu0 0.0
        %939 = vmatpush1.msra.mxu0 0.0
        %940 = vmatprep.subr.mxu0 %v623
        %941 = vmatpush1.msra.mxu0 %v622
        %942 = vmatprep.subr.mxu0 %v621
        %943 = vmatpush1.msra.mxu0 %v620
        %944 = vmatprep.subr.mxu0 %v619
        %945 = vmatpush1.msra.mxu0 %v618
        %946 = vmatprep.subr.mxu0 %v617
        %947 = vmatpush1.msra.mxu0 %v616
        %948 = vmatprep.subr.mxu0 0.0
        %949 = vmatpush2.msra.mxu0 0.0
        %950 = vmatprep.subr.mxu0 0.0
        %951 = vmatpush2.msra.mxu0 0.0
        %952 = vmatprep.subr.mxu0 0.0
        %953 = vmatpush2.msra.mxu0 0.0
        %954 = vmatprep.subr.mxu0 0.0
        %955 = vmatpush2.msra.mxu0 0.0
        %956 = vmatprep.subr.mxu0 0.0
        %957 = vmatpush2.msra.mxu0 0.0
        %958 = vmatprep.subr.mxu0 0.0
        %959 = vmatpush2.msra.mxu0 0.0
        %960 = vmatprep.subr.mxu0 0.0
        %961 = vmatpush2.msra.mxu0 0.0
        %962 = vmatprep.subr.mxu0 0.0
        %963 = vmatpush2.msra.mxu0 0.0
        %964 = vmatprep.subr.mxu0 0.0
        %965 = vmatpush2.msra.mxu0 0.0
        %966 = vmatprep.subr.mxu0 0.0
        %967 = vmatpush2.msra.mxu0 0.0
        %968 = vmatprep.subr.mxu0 0.0
        %969 = vmatpush2.msra.mxu0 0.0
        %970 = vmatprep.subr.mxu0 0.0
        %971 = vmatpush2.msra.mxu0 0.0
        %972 = vmatprep.subr.mxu0 0.0
        %973 = vmatpush2.msra.mxu0 0.0
        %974 = vmatprep.subr.mxu0 0.0
        %975 = vmatpush2.msra.mxu0 0.0
        %976 = vmatprep.subr.mxu0 0.0
        %977 = vmatpush2.msra.mxu0 0.0
        %978 = vmatprep.subr.mxu0 0.0
        %979 = vmatpush2.msra.mxu0 0.0
        %980 = vmatprep.mubr.f32.mxu0 0.0
        %981 = vmatmul.mubr.f32.gmra.mxu0 %v780
        %v982 = vpop.f32.mrf.mxu0
        %v983 = vadd.f32 %v870, %v982
        %v984 = vpop.f32.mrf.mxu0
        %v985 = vadd.f32 %v872, %v984
        %986 = vmatprep.mubr.f32.mxu0 0.0
        %987 = vmatmul.mubr.f32.gmra.mxu0 %v783
        %v988 = vpop.f32.mrf.mxu0
        %v989 = vadd.f32 %v876, %v988
        %v990 = vpop.f32.mrf.mxu0
        %v991 = vadd.f32 %v878, %v990
        %992 = vmatprep.mubr.f32.mxu0 0.0
        %993 = vmatmul.mubr.f32.gmra.mxu0 %v786
        %v994 = vpop.f32.mrf.mxu0
        %v995 = vadd.f32 %v882, %v994
        %v996 = vpop.f32.mrf.mxu0
        %v997 = vadd.f32 %v884, %v996
        %998 = vmatprep.mubr.f32.mxu0 0.0
        %999 = vmatmul.mubr.f32.gmra.mxu0 %v789
        %v1000 = vpop.f32.mrf.mxu0
        %v1001 = vadd.f32 %v888, %v1000
        %v1002 = vpop.f32.mrf.mxu0
        %v1003 = vadd.f32 %v890, %v1002
        %1004 = vmatprep.mubr.f32.mxu0 0.0
        %1005 = vmatmul.mubr.f32.gmra.mxu0 %v792
        %v1006 = vpop.f32.mrf.mxu0
        %v1007 = vadd.f32 %v894, %v1006
        %v1008 = vpop.f32.mrf.mxu0
        %v1009 = vadd.f32 %v896, %v1008
        %1010 = vmatprep.mubr.f32.mxu0 0.0
        %1011 = vmatmul.mubr.f32.gmra.mxu0 %v795
        %v1012 = vpop.f32.mrf.mxu0
        %v1013 = vadd.f32 %v900, %v1012
        %v1014 = vpop.f32.mrf.mxu0
        %v1015 = vadd.f32 %v902, %v1014
        %1016 = vmatprep.mubr.f32.mxu0 0.0
        %1017 = vmatmul.mubr.f32.gmra.mxu0 %v798
        %v1018 = vpop.f32.mrf.mxu0
        %v1019 = vadd.f32 %v906, %v1018
        %v1020 = vpop.f32.mrf.mxu0
        %v1021 = vadd.f32 %v908, %v1020
        %1022 = vmatprep.mubr.f32.mxu0 0.0
        %1023 = vmatmul.mubr.f32.gmra.mxu0 %v801
        %v1024 = vpop.f32.mrf.mxu0
        %v1025 = vadd.f32 %v912, %v1024
        %v1026 = vpop.f32.mrf.mxu0
        %v1027 = vadd.f32 %v914, %v1026
        %1028 = vdwg.mxu0
        %1029 = vst [vmem:[%s204] sm:$0xff] %v983
        %1030 = vst [vmem:[%s204 + $0x8] sm:$0xff] %v985
        %1031 = vst [vmem:[%s204 + $0x10] sm:$0xff] %v989
        %1032 = vst [vmem:[%s204 + $0x18] sm:$0xff] %v991
        %1033 = vst [vmem:[%s204 + $0x20] sm:$0xff] %v995
        %1034 = vst [vmem:[%s204 + $0x28] sm:$0xff] %v997
        %1035 = vst [vmem:[%s204 + $0x30] sm:$0xff] %v1001
        %1036 = vst [vmem:[%s204 + $0x38] sm:$0xff] %v1003
        %1037 = vst [vmem:[%s204 + $0x40] sm:$0xff] %v1007
        %1038 = vst [vmem:[%s204 + $0x48] sm:$0xff] %v1009
        %1039 = vst [vmem:[%s204 + $0x50] sm:$0xff] %v1013
        %1040 = vst [vmem:[%s204 + $0x58] sm:$0xff] %v1015
        %1041 = vst [vmem:[%s204 + $0x60] sm:$0xff] %v1019
        %1042 = vst [vmem:[%s204 + $0x68] sm:$0xff] %v1021
        %1043 = vst [vmem:[%s204 + $0x70] sm:$0xff] %v1025
        %1044 = vst [vmem:[%s204 + $0x78] sm:$0xff] %v1027
        %s1045 = sand.u32 %s97, 1
        %s1046 = scalar_lea.sflag [#allocation5], %s1045
        %s1047 = sand.u32 %s97, 1
        %s1048 = smul.addr %s1047, 128
        %s1049 = scalar_lea.vmem [#allocation8], %s1048
        // Predicated region
        $region41: #{tpu_custom_call.1} parent=31 // pred_check
          %p1050 = pneg %p107
        $region42: #{tpu_custom_call.1} parent=31 // pred_check_branch
          %1052 = sbr.rel (%p1050) target = $region44
        $region43: #{tpu_custom_call.1} parent=31 // pred_region
          %s1053 = smul.u32 8, %s21
          %s1055 = ssub.s32 2048, 2048
          %1056 = vsyncadd %s1046, %s1055
          %s1057 = smul.addr %s1053, 2
          %s1058 = smul.addr %s1057, 128
          %s1059 = scalar_lea.hbm %s3, %s1058
          %s1060 = sshll.u32 %s1049, 4
          %s1061 = int_to_ptr.vmem [resolvable:$true] %s1060
          %1066 = dma.vmem_to_hbm [thread:$0]  %s1061, 2048, %s1059, %s1046, 256, 256, 16
        $region44: #{tpu_custom_call.1} parent=31 // pred_fallthru
          _
      $region32: #{tpu_custom_call.1} parent=5 // pred_fallthru
        _
      %p1067 = scmp.le.s32.totalorder 2, %s16
      // Predicated region
      $region45: #{tpu_custom_call.1} parent=5 // pred_check
        %p1068 = pneg %p1067
      $region46: #{tpu_custom_call.1} parent=5 // pred_check_branch
        %1070 = sbr.rel (%p1068) target = $region48
      $region47: #{tpu_custom_call.1} parent=5 // pred_region
        %s1071 = ssub.s32 %s16, 2
        // Predicated region
        $region49: #{tpu_custom_call.1} parent=47 // pred_check
          %p1072 = pneg %p113
        $region50: #{tpu_custom_call.1} parent=47 // pred_check_branch
          %1074 = sbr.rel (%p1072) target = $region52
        $region51: #{tpu_custom_call.1} parent=47 // pred_region
          %s1075 = sand.u32 %s98, 1
          %s1076 = scalar_lea.sflag [#allocation5], %s1075
          %s1077 = sand.u32 %s98, 1
          %s1078 = smul.addr %s1077, 128
          %s1079 = scalar_lea.vmem [#allocation8], %s1078
          %1080 = dma.done %s1076, 2048
        $region52: #{tpu_custom_call.1} parent=47 // pred_fallthru
          _
      $region48: #{tpu_custom_call.1} parent=5 // pred_fallthru
        _
    $region6: #{tpu_custom_call.1} parent=1 // loop_footer
      %s20 = sadd.s32 1, %s16
    $region7: #{tpu_custom_call.1} parent=1 // loop_footer_branch
      %15 = sbr.rel target = $region3
    $region8: #{tpu_custom_call.1} parent=1 // loop_exit
      _
    %1081 = vsyncpa [#allocation4], 1
    %s1082 = scalar_lea.sflag [#allocation4], 1
    %1083 = vsyncpa %s1082, 1
    %1084 = vsyncpa [#allocation7], 1
    %1085 = vsyncpa [#allocation5], 1
    %s1086 = scalar_lea.sflag [#allocation5], 1
    %1087 = vsyncpa %s1086, 1

</llo_original>
